<compile_context>
chip_gen: v7x
topology: tpu7x:2x2x1
jax: 0.10.0
libtpu: 0.0.40
codegen_flags: <defaults>
</compile_context>

<pallas_src>
import jax
import jax.numpy as jnp
from jax.experimental import pallas as pl
from jax.experimental.pallas import tpu as pltpu

NUM_LAYERS = 3  # number of invertible modules in the sequence


def _cdiv(a, b):
    return -(-a // b)


def _round_up(a, b):
    return _cdiv(a, b) * b


# --------------------------------------------------------------------------
# Kernels
# --------------------------------------------------------------------------
def _seqnf_rowparam_kernel(x_ref, ld_ref, p_ref, xo_ref, ldo_ref):
    """Row-tiled layout.

    x_ref/ld_ref: (TILE_R, HW)   activations + pixel-wise logdet
    p_ref:        (TILE_R, 3)    packed per-row composites [A | D | S] (f32)
    """
    p = p_ref[...]                       # single small load, then lane slices
    a = p[:, 0:1]
    d = p[:, 1:2]
    s = p[:, 2:3]
    x = x_ref[...].astype(jnp.float32)
    ld = ld_ref[...].astype(jnp.float32)
    xo_ref[...] = (x * a + d).astype(xo_ref.dtype)
    ldo_ref[...] = (ld + s).astype(ldo_ref.dtype)


def _seqnf_lanebcast_kernel(x_ref, ld_ref, p_ref, xo_ref, ldo_ref):
    """Batch-row layout for HW % 128 != 0.

    x_ref/ld_ref: (TILE_B, C*HW)
    p_ref:        (3, C*HW)      grid-resident per-lane composites [A; D; S]
    """
    a = p_ref[0:1, :]
    d = p_ref[1:2, :]
    s = p_ref[2:3, :]
    x = x_ref[...].astype(jnp.float32)
    ld = ld_ref[...].astype(jnp.float32)
    xo_ref[...] = (x * a + d).astype(xo_ref.dtype)
    ldo_ref[...] = (ld + s).astype(ldo_ref.dtype)


# --------------------------------------------------------------------------
# Wrapper
# --------------------------------------------------------------------------
def _fold_affine_chain(log_scales, biases):
    """Fold L affine layers into per-channel composites: x*A + D, ld + S."""
    L, C = log_scales.shape
    A = jnp.ones((C,), jnp.float32)
    D = jnp.zeros((C,), jnp.float32)
    S = jnp.zeros((C,), jnp.float32)
    for l in range(L):
        s_l = log_scales[l].astype(jnp.float32)
        b_l = biases[l].astype(jnp.float32)
        sc = jnp.exp(s_l)
        A = A * sc
        D = D * sc + b_l
        S = S + s_l
    return A, D, S


def _vmem_limit_bytes():
    """Per-generation scoped-VMEM budget (v5e/v6e -> 64 MiB, v7x -> 48 MiB)."""
    cap = 64 * 1024 * 1024  # conservative default = v7x per-TC physical VMEM
    try:
        info = pltpu.get_tpu_info()
        for attr in ("vmem_capacity_bytes", "vmem_size_bytes", "vmem_bytes"):
            v = getattr(info, attr, None)
            if v:
                cap = int(v)
                break
    except Exception:
        pass
    return min((cap * 3) // 4, 64 * 1024 * 1024)


def _pick_tile_rows(rows, sub, cap):
    """Largest row tile <= cap, multiple of `sub`, preferring a divisor of rows."""
    if rows <= sub:
        return rows                      # full dim (always a legal block shape)
    cap = max(sub, min(cap, rows))
    cap = (cap // sub) * sub
    for t in range(cap, sub - 1, -sub):  # prefer exact divisor -> no masked tail
        if rows % t == 0:
            return t
    return cap


def sequential_nf_forward(inputs, logdets, log_scales, biases, *,
                          force_pallas=False):
    """Mirror of SequentialNF.forward for single-tensor tuples.

    inputs:  tuple of one [B, C, H, W] tensor
    logdets: tuple of one [B, C, H, W] tensor
    log_scales, biases: [L, C] per-module parameters
    Returns: (outputs_tuple, logdets_tuple); x in input dtype, logdet in f32.
    """
    (x,) = inputs
    (ld,) = logdets
    B, C, H, W = x.shape
    HW = H * W
    assert log_scales.shape[0] == NUM_LAYERS
    io_dtype = x.dtype
    io_itemsize = jnp.dtype(io_dtype).itemsize

    A, D, S = _fold_affine_chain(log_scales, biases)

    # ---- Tiny-problem fast path: fused XLA beats launch + pipeline ramp. ----
    total_bytes = x.size * io_itemsize
    if (not force_pallas) and total_bytes < 256 * 1024:
        a4 = A.reshape(1, C, 1, 1)
        d4 = D.reshape(1, C, 1, 1)
        s4 = S.reshape(1, C, 1, 1)
        xo = (x.astype(jnp.float32) * a4 + d4).astype(io_dtype)
        ldo = ld.astype(jnp.float32) + s4
        return (xo,), (ldo,)

    vmem_limit = _vmem_limit_bytes()
    budget = (vmem_limit * 2) // 3         # headroom for params + scratch
    sub = max(8, 32 // io_itemsize)        # sublane pack: 8 f32 / 16 bf16 / 32 i8
    MIN_GRID_STEPS = 8                     # keep a splittable grid for v7x 2 TCs

    if HW % 128 == 0:
        # ---- Layout A: rows = B*C (lane-dense HW last dim). ----
        rows, lanes = B * C, HW
        kernel = _seqnf_rowparam_kernel
        # per-row bytes: x_in + ld_in + x_out (io) + ld_out (f32) + padded params
        per_row = lanes * (3 * io_itemsize + 4) + 512
        cap = min(budget // (2 * per_row),
                  _round_up(_cdiv(rows, MIN_GRID_STEPS), sub))
        tile_r = _pick_tile_rows(rows, sub, cap)
        x2 = x.reshape(rows, lanes)
        ld2 = ld.reshape(rows, lanes)
        params = jnp.tile(jnp.stack([A, D, S], axis=-1), (B, 1))  # (rows, 3)
        par_spec = pl.BlockSpec((tile_r, 3), lambda i: (i, 0))
    else:
        # ---- Layout B: rows = B, lanes = C*HW; resident broadcast params. ----
        # TODO(synk): if C*HW % 128 != 0 stores are still masked; pad lanes to
        # a multiple of 128 for fully unmasked writes.
        rows, lanes = B, C * HW
        kernel = _seqnf_lanebcast_kernel
        per_row = lanes * (3 * io_itemsize + 4)
        cap = min(budget // (2 * per_row),
                  _round_up(_cdiv(rows, MIN_GRID_STEPS), sub))
        tile_r = _pick_tile_rows(rows, sub, cap)
        x2 = x.reshape(rows, lanes)
        ld2 = ld.reshape(rows, lanes)
        params = jnp.stack(
            [jnp.repeat(A, HW), jnp.repeat(D, HW), jnp.repeat(S, HW)], axis=0
        )  # (3, lanes), resident across the grid
        par_spec = pl.BlockSpec((3, lanes), lambda i: (0, 0))

    grid = (_cdiv(rows, tile_r),)
    act_spec = pl.BlockSpec((tile_r, lanes), lambda i: (i, 0))

    out_x, out_ld = pl.pallas_call(
        kernel,
        out_shape=(
            jax.ShapeDtypeStruct((rows, lanes), io_dtype),
            jax.ShapeDtypeStruct((rows, lanes), jnp.float32),  # logdet in f32
        ),
        grid_spec=pltpu.PrefetchScalarGridSpec(
            num_scalar_prefetch=0,
            grid=grid,
            in_specs=[act_spec, act_spec, par_spec],
            out_specs=[act_spec, act_spec],
        ),
        compiler_params=pltpu.CompilerParams(
            dimension_semantics=("parallel",),
            vmem_limit_bytes=vmem_limit,
        ),
    )(x2, ld2, params)

    return (out_x.reshape(B, C, H, W),), (out_ld.reshape(B, C, H, W),)


def _reference_forward(inputs, logdets, log_scales, biases):
    """Pure-JAX layer-by-layer reference of the same sequential flow."""
    (x,) = inputs
    (ld,) = logdets
    L, C = log_scales.shape
    x = x.astype(jnp.float32)
    ld = ld.astype(jnp.float32)
    for l in range(L):
        s = log_scales[l].reshape(1, C, 1, 1).astype(jnp.float32)
        b = biases[l].reshape(1, C, 1, 1).astype(jnp.float32)
        x = x * jnp.exp(s) + b
        ld = ld + s
    return (x,), (ld,)


if __name__ == "__main__":
    # Small shapes consistent with the module: batch=2, channels=4, spatial=16.
    B, C, H, W = 2, 4, 16, 16

    key = jax.random.PRNGKey(0)
    kx, ks, kb = jax.random.split(key, 3)
    x = jax.random.normal(kx, (B, C, H, W), dtype=jnp.float32)
    logdet = jnp.zeros((B, C, H, W), dtype=jnp.float32)

    # Deterministic parameter init for the NUM_LAYERS invertible modules.
    log_scales = 0.1 * jax.random.normal(ks, (NUM_LAYERS, C), dtype=jnp.float32)
    biases = 0.1 * jax.random.normal(kb, (NUM_LAYERS, C), dtype=jnp.float32)

    # Lane-dense layout (HW = 256, multiple of 128).
    (out,), (out_ld,) = sequential_nf_forward(
        (x,), (logdet,), log_scales, biases, force_pallas=True
    )
    jax.block_until_ready(out)
    jax.block_until_ready(out_ld)

    (ref_out,), (ref_ld,) = _reference_forward(
        (x,), (logdet,), log_scales, biases
    )
    assert jnp.allclose(out, ref_out, rtol=1e-5, atol=1e-5)
    assert jnp.allclose(out_ld, ref_ld, rtol=1e-5, atol=1e-5)

    # Non-lane-dense spatial size (HW = 64) -> batch-row layout with resident
    # broadcast params; lanes = C*HW = 256 stays a multiple of 128.
    H2 = W2 = 8
    x_b = jax.random.normal(kx, (B, C, H2, W2), dtype=jnp.float32)
    ld_b = jnp.zeros_like(x_b)
    (out_b,), (out_ld_b,) = sequential_nf_forward(
        (x_b,), (ld_b,), log_scales, biases, force_pallas=True
    )
    jax.block_until_ready(out_b)
    jax.block_until_ready(out_ld_b)
    (ref_b,), (ref_ld_b,) = _reference_forward((x_b,), (ld_b,), log_scales, biases)
    assert jnp.allclose(out_b, ref_b, rtol=1e-5, atol=1e-5)
    assert jnp.allclose(out_ld_b, ref_ld_b, rtol=1e-5, atol=1e-5)

    print("KERNEL_OK")
</pallas_src>

<mosaic_0001>
module attributes {stable_mosaic.version = 11 : i64} {
  func.func @_seqnf_rowparam_kernel(%arg0: i32, %arg1: memref<8x256xf32, #tpu.memory_space<vmem>>, %arg2: memref<8x256xf32, #tpu.memory_space<vmem>>, %arg3: memref<8x3xf32, #tpu.memory_space<vmem>>, %arg4: memref<8x256xf32, #tpu.memory_space<vmem>>, %arg5: memref<8x256xf32, #tpu.memory_space<vmem>>) attributes {dimension_semantics = [#tpu.dimension_semantics<parallel>], iteration_bounds = array<i64: 1>, scalar_prefetch = 0 : i64, scratch_operands = 0 : i64, tpu.core_type = #tpu.core_type<tc>, window_params = [{transform_indices = @transform_0, window_bounds = array<i64: 8, 256>}, {transform_indices = @transform_1, window_bounds = array<i64: 8, 256>}, {transform_indices = @transform_2, window_bounds = array<i64: 8, 3>}, {transform_indices = @transform_3, window_bounds = array<i64: 8, 256>}, {transform_indices = @transform_4, window_bounds = array<i64: 8, 256>}]} {
    %c0 = arith.constant 0 : index
    %c0_0 = arith.constant 0 : index
    %0 = vector.load %arg3[%c0, %c0_0] : memref<8x3xf32, #tpu.memory_space<vmem>>, vector<8x3xf32>
    %1 = vector.extract_strided_slice %0 {offsets = [0, 0], sizes = [8, 1], strides = [1, 1]} : vector<8x3xf32> to vector<8x1xf32>
    %2 = vector.extract_strided_slice %0 {offsets = [0, 1], sizes = [8, 1], strides = [1, 1]} : vector<8x3xf32> to vector<8x1xf32>
    %3 = vector.extract_strided_slice %0 {offsets = [0, 2], sizes = [8, 1], strides = [1, 1]} : vector<8x3xf32> to vector<8x1xf32>
    %c0_1 = arith.constant 0 : index
    %c0_2 = arith.constant 0 : index
    %4 = vector.load %arg1[%c0_1, %c0_2] : memref<8x256xf32, #tpu.memory_space<vmem>>, vector<8x256xf32>
    %c0_3 = arith.constant 0 : index
    %c0_4 = arith.constant 0 : index
    %5 = vector.load %arg2[%c0_3, %c0_4] : memref<8x256xf32, #tpu.memory_space<vmem>>, vector<8x256xf32>
    %6 = vector.broadcast %1 : vector<8x1xf32> to vector<8x256xf32>
    %7 = arith.mulf %4, %6 : vector<8x256xf32>
    %8 = vector.broadcast %2 : vector<8x1xf32> to vector<8x256xf32>
    %9 = arith.addf %7, %8 : vector<8x256xf32>
    %c0_5 = arith.constant 0 : index
    %c0_6 = arith.constant 0 : index
    %10 = vector.load %arg4[%c0_5, %c0_6] : memref<8x256xf32, #tpu.memory_space<vmem>>, vector<8x256xf32>
    tpu.vector_store %arg4[%c0_5, %c0_6], %9 {strides = array<i32>} : memref<8x256xf32, #tpu.memory_space<vmem>>, vector<8x256xf32>,
    %11 = vector.broadcast %3 : vector<8x1xf32> to vector<8x256xf32>
    %12 = arith.addf %5, %11 : vector<8x256xf32>
    %c0_7 = arith.constant 0 : index
    %c0_8 = arith.constant 0 : index
    %13 = vector.load %arg5[%c0_7, %c0_8] : memref<8x256xf32, #tpu.memory_space<vmem>>, vector<8x256xf32>
    tpu.vector_store %arg5[%c0_7, %c0_8], %12 {strides = array<i32>} : memref<8x256xf32, #tpu.memory_space<vmem>>, vector<8x256xf32>,
    return
  }
  func.func @transform_0(%arg0: i32) -> (i32, i32) {
    %c0_i32 = arith.constant 0 : i32
    %c0_i32_0 = arith.constant 0 : i32
    return %arg0, %c0_i32 : i32, i32
  }
  func.func @transform_1(%arg0: i32) -> (i32, i32) {
    %c0_i32 = arith.constant 0 : i32
    %c0_i32_0 = arith.constant 0 : i32
    return %arg0, %c0_i32 : i32, i32
  }
  func.func @transform_2(%arg0: i32) -> (i32, i32) {
    %c0_i32 = arith.constant 0 : i32
    %c0_i32_0 = arith.constant 0 : i32
    return %arg0, %c0_i32 : i32, i32
  }
  func.func @transform_3(%arg0: i32) -> (i32, i32) {
    %c0_i32 = arith.constant 0 : i32
    %c0_i32_0 = arith.constant 0 : i32
    return %arg0, %c0_i32 : i32, i32
  }
  func.func @transform_4(%arg0: i32) -> (i32, i32) {
    %c0_i32 = arith.constant 0 : i32
    %c0_i32_0 = arith.constant 0 : i32
    return %arg0, %c0_i32 : i32, i32
  }
}

</mosaic_0001>

<llo_original>
// kernel: tpu_custom_call.1
$region0: #{tpu_custom_call.1}
  #allocation0 [shape = 'u32[]', space=smem, size = 0x4, offset = 0x4, fixed_abs, tag = 'smem constant byte address 0x4 - core index']
  #allocation1 [shape = 'u32[144,128]{1,0:T(1,128)}', space=vmem, size = 0x12000, scoped, tag = 'internal scratch']
  %s0 = inlined_call_operand.hbm [shape: f32[8,256], index: 0, kind: input, shape index: {}]
  %s1 = inlined_call_operand.hbm [shape: f32[8,256], index: 1, kind: input, shape index: {}]
  %s2 = inlined_call_operand.vmem [shape: f32[8,3], index: 2, kind: input, shape index: {}]
  %s3 = inlined_call_operand.hbm [shape: f32[8,256], index: 3, kind: output, shape index: {0}]
  %s4 = inlined_call_operand.hbm [shape: f32[8,256], index: 4, kind: output, shape index: {1}]
  %5 = xla_tuple %s3, %s4
  %s6 = sld [smem:[#allocation0]]
  $region38: #{tpu_custom_call.1} parent=0
    _
  %s8 = ssub.s32 1, %s6
  %s9 = scalar_select 0, %s8, %s6
  $region1: #{tpu_custom_call.1} parent=0
    #allocation2 [shape = 'u8[8192]{0}', space=vmem, size = 0x2000, scoped, tag = 'input window, operand 0, single buffered']
    #allocation3 [shape = 's32[1]{0}', space=sflag, size = 0x4, scoped, tag = 'scoped memory for tpu_custom_call.1']
    #allocation4 [shape = 's32[1]{0}', space=sflag, size = 0x4, scoped, tag = 'scoped memory for tpu_custom_call.1']
    #allocation5 [shape = 'u8[8192]{0}', space=vmem, size = 0x2000, scoped, tag = 'input window, operand 1, single buffered']
    #allocation6 [shape = 's32[1]{0}', space=sflag, size = 0x4, scoped, tag = 'scoped memory for tpu_custom_call.1']
    #allocation7 [shape = 'u8[8192]{0}', space=vmem, size = 0x2000, scoped, tag = 'output window, operand 0, single buffered']
    #allocation8 [shape = 'u8[8192]{0}', space=vmem, size = 0x2000, scoped, tag = 'output window, operand 1, single buffered']
    #allocation9 [shape = 's32[1]{0}', space=sflag, size = 0x4, scoped, tag = 'scoped memory for tpu_custom_call.1']
    %10 = vsyncpa [#allocation3], 0
    %11 = vsyncpa [#allocation6], 0
    %12 = vsyncpa [#allocation4], 0
    %13 = vsyncpa [#allocation9], 0
    // Predicated region
    $region2: #{tpu_custom_call.1} parent=1 // pred_check
      _
    $region3: #{tpu_custom_call.1} parent=1 // pred_check_branch
      %15 = sbr.rel (0) target = $region5
    $region4: #{tpu_custom_call.1} parent=1 // pred_region
      %s17 = ssub.s32 256, 256
      %18 = vsyncadd [#allocation3], %s17
      %s20 = sshll.u32 [#allocation2], 4
      %s21 = int_to_ptr.vmem [resolvable:$true] %s20
      %23 = dma.hbm_to_vmem [thread:$0]  %s0, 256, %s21, [#allocation3]
    $region5: #{tpu_custom_call.1} parent=1 // pred_fallthru
      _
    // Predicated region
    $region6: #{tpu_custom_call.1} parent=1 // pred_check
      _
    $region7: #{tpu_custom_call.1} parent=1 // pred_check_branch
      %25 = sbr.rel (0) target = $region9
    $region8: #{tpu_custom_call.1} parent=1 // pred_region
      %s27 = ssub.s32 256, 256
      %28 = vsyncadd [#allocation6], %s27
      %s30 = sshll.u32 [#allocation5], 4
      %s31 = int_to_ptr.vmem [resolvable:$true] %s30
      %33 = dma.hbm_to_vmem [thread:$0]  %s1, 256, %s31, [#allocation6]
    $region9: #{tpu_custom_call.1} parent=1 // pred_fallthru
      _
    // Predicated region
    $region10: #{tpu_custom_call.1} parent=1 // pred_check
      _
    $region11: #{tpu_custom_call.1} parent=1 // pred_check_branch
      %35 = sbr.rel (0) target = $region13
    $region12: #{tpu_custom_call.1} parent=1 // pred_region
      _
    $region13: #{tpu_custom_call.1} parent=1 // pred_fallthru
      _
    // Predicated region
    $region14: #{tpu_custom_call.1} parent=1 // pred_check
      _
    $region15: #{tpu_custom_call.1} parent=1 // pred_check_branch
      %37 = sbr.rel (0) target = $region17
    $region16: #{tpu_custom_call.1} parent=1 // pred_region
      %38 = dma.done [#allocation3], 256
    $region17: #{tpu_custom_call.1} parent=1 // pred_fallthru
      _
    // Predicated region
    $region18: #{tpu_custom_call.1} parent=1 // pred_check
      _
    $region19: #{tpu_custom_call.1} parent=1 // pred_check_branch
      %40 = sbr.rel (0) target = $region21
    $region20: #{tpu_custom_call.1} parent=1 // pred_region
      %41 = dma.done [#allocation6], 256
    $region21: #{tpu_custom_call.1} parent=1 // pred_fallthru
      _
    %v42 = vld [vmem:[%s2] sm:$0xff]
    %v43 = vld [vmem:[#allocation2] sm:$0xff]
    %v44 = vld [vmem:[#allocation2 + $0x8] sm:$0xff]
    %v45 = vld [vmem:[#allocation5] sm:$0xff]
    %v46 = vld [vmem:[#allocation5 + $0x8] sm:$0xff]
    %48 = vset.pattern.permute.xlu0 0
    %49 = vperm.xlu0 %48, %v42
    %v50 = vpop.permute.xlu0 %49
    %v52 = vmul.f32 %v43, %v50
    %v53 = vmul.f32 %v44, %v50
    %54 = vset.pattern.permute.xlu0 1
    %55 = vperm.xlu0 %54, %v42
    %v56 = vpop.permute.xlu0 %55
    %v58 = vadd.f32 %v52, %v56
    %v59 = vadd.f32 %v53, %v56
    %60 = vst [vmem:[#allocation7] sm:$0xff] %v58
    %61 = vst [vmem:[#allocation7 + $0x8] sm:$0xff] %v59
    %62 = vset.pattern.permute.xlu0 2
    %63 = vperm.xlu0 %62, %v42
    %v64 = vpop.permute.xlu0 %63
    %v66 = vadd.f32 %v45, %v64
    %v67 = vadd.f32 %v46, %v64
    %68 = vst [vmem:[#allocation8] sm:$0xff] %v66
    %69 = vst [vmem:[#allocation8 + $0x8] sm:$0xff] %v67
    // Predicated region
    $region22: #{tpu_custom_call.1} parent=1 // pred_check
      _
    $region23: #{tpu_custom_call.1} parent=1 // pred_check_branch
      %71 = sbr.rel (0) target = $region25
    $region24: #{tpu_custom_call.1} parent=1 // pred_region
      %s73 = ssub.s32 256, 256
      %74 = vsyncadd [#allocation4], %s73
      %s76 = sshll.u32 [#allocation7], 4
      %s77 = int_to_ptr.vmem [resolvable:$true] %s76
      %79 = dma.vmem_to_hbm [thread:$0]  %s77, 256, %s3, [#allocation4]
    $region25: #{tpu_custom_call.1} parent=1 // pred_fallthru
      _
    // Predicated region
    $region26: #{tpu_custom_call.1} parent=1 // pred_check
      _
    $region27: #{tpu_custom_call.1} parent=1 // pred_check_branch
      %81 = sbr.rel (0) target = $region29
    $region28: #{tpu_custom_call.1} parent=1 // pred_region
      %s83 = ssub.s32 256, 256
      %84 = vsyncadd [#allocation9], %s83
      %s86 = sshll.u32 [#allocation8], 4
      %s87 = int_to_ptr.vmem [resolvable:$true] %s86
      %89 = dma.vmem_to_hbm [thread:$0]  %s87, 256, %s4, [#allocation9]
    $region29: #{tpu_custom_call.1} parent=1 // pred_fallthru
      _
    // Predicated region
    $region30: #{tpu_custom_call.1} parent=1 // pred_check
      _
    $region31: #{tpu_custom_call.1} parent=1 // pred_check_branch
      %91 = sbr.rel (0) target = $region33
    $region32: #{tpu_custom_call.1} parent=1 // pred_region
      %92 = dma.done [#allocation4], 256
    $region33: #{tpu_custom_call.1} parent=1 // pred_fallthru
      _
    // Predicated region
    $region34: #{tpu_custom_call.1} parent=1 // pred_check
      _
    $region35: #{tpu_custom_call.1} parent=1 // pred_check_branch
      %94 = sbr.rel (0) target = $region37
    $region36: #{tpu_custom_call.1} parent=1 // pred_region
      %95 = dma.done [#allocation9], 256
    $region37: #{tpu_custom_call.1} parent=1 // pred_fallthru
      _
    %96 = vsyncpa [#allocation3], 1
    %97 = vsyncpa [#allocation6], 1
    %98 = vsyncpa [#allocation4], 1
    %99 = vsyncpa [#allocation9], 1

</llo_original>
